<compile_context>
chip_gen: v5e
topology: v5e:2x2
jax: 0.10.0
libtpu: 0.0.40
codegen_flags: <defaults>
</compile_context>

<pallas_src>
import jax
import jax.numpy as jnp
from jax.experimental import pallas as pl
from jax.experimental.pallas import tpu as pltpu


def _mlp_attn_kernel(enc_ref, w1at_ref, bias_ref, w2_ref, b2_ref, out_ref):
    enc_f32 = enc_ref[...]                                   # (S, H) f32

    # fc1 on the encoder half of the concat; the decoder half + b1 are already
    # folded into bias_ref.  enc is cast to the (possibly bf16) weight dtype
    # only for the MXU push; accumulation is f32.
    lhs = enc_f32.astype(w1at_ref.dtype)
    h = jnp.dot(lhs, w1at_ref[...], preferred_element_type=jnp.float32)
    h = jnp.tanh(h + bias_ref[...])                          # (S, H) f32

    # fc2 -> (S, 1) scores via VPU multiply + lane reduce (no N=1 MXU matmul).
    score = jnp.sum(h * w2_ref[...], axis=-1, keepdims=True) + b2_ref[0]

    # Softmax over the sequence axis (dim=0 in the PyTorch code).  Exact
    # normalization: approx reciprocal broke the 1e-4 tolerance.
    m = jnp.max(score, axis=0, keepdims=True)
    e = jnp.exp(score - m)
    w = e / jnp.sum(e, axis=0, keepdims=True)                # (S, 1)

    # attn_applied = w.T @ enc as a broadcast-multiply + sublane reduce (no
    # transpose, no M=1 MXU matmul).  enc stays f32 here so the output does not
    # inherit bf16 quantization of the encoder states.
    out_ref[...] = jnp.sum(w * enc_f32, axis=0, keepdims=True).astype(out_ref.dtype)


def prepare_params(params, hidden_size, *, compute_dtype=jnp.bfloat16):
    """One-time parameter prep (call once, NOT per forward)."""
    H = hidden_size
    w1, b1, w2, b2 = params["w1"], params["b1"], params["w2"], params["b2"]
    return {
        # Encoder half of fc1, pre-transposed so the kernel never runs an
        # in-kernel / per-call (H,H) transpose.
        "w1a_t": jnp.asarray(w1[:, :H]).T.astype(compute_dtype),   # (H, H)
        # Decoder half of fc1, pre-transposed; consumed by the fused-bias GEMV.
        "w1b_t": jnp.asarray(w1[:, H:]).T.astype(compute_dtype),   # (H, H)
        "b1_row": b1.reshape(1, H).astype(jnp.float32),
        "w2_row": w2.reshape(1, H).astype(jnp.float32),
        "b2": b2.reshape(1).astype(jnp.float32),
    }


@jax.jit
def mlp_attention(encoder_hiddens, decoder_hidden, prepared):
    """encoder_hiddens: (S, 1, H); decoder_hidden: (1, 1, H) -> (1, 1, H) f32."""
    S, _, H = encoder_hiddens.shape
    enc = encoder_hiddens.reshape(S, H).astype(jnp.float32)
    dec = decoder_hidden.reshape(1, H).astype(jnp.float32)

    # Decoder branch of fc1 hoisted out of the kernel as a fused (1, H) bias.
    fused_bias = dec @ prepared["w1b_t"].astype(jnp.float32) + prepared["b1_row"]

    w_bytes = prepared["w1a_t"].size * prepared["w1a_t"].dtype.itemsize
    cost = pl.CostEstimate(
        flops=2 * S * H * (H + 2),
        transcendentals=S * H + S,
        bytes_accessed=w_bytes + (S * H + 3 * H + H) * 4,
    )

    out = pl.pallas_call(
        _mlp_attn_kernel,
        out_shape=jax.ShapeDtypeStruct((1, H), jnp.float32),
        in_specs=[
            pl.BlockSpec((S, H), lambda: (0, 0)),   # enc (f32, unpadded, full extent)
            pl.BlockSpec((H, H), lambda: (0, 0)),   # W1a.T (pre-transposed, one-time prep)
            pl.BlockSpec((1, H), lambda: (0, 0)),   # fused bias = b1 + dec @ W1b.T
            pl.BlockSpec((1, H), lambda: (0, 0)),   # fc2 weight as a row
            pl.BlockSpec(memory_space=pltpu.MemorySpace.SMEM),   # b2 scalar
        ],
        out_specs=pl.BlockSpec((1, H), lambda: (0, 0)),
        cost_estimate=cost,
    )(enc, prepared["w1a_t"], fused_bias, prepared["w2_row"], prepared["b2"])

    return out.reshape(1, 1, H)


def init_params(key, hidden_size):
    """Deterministic synthetic init matching nn.Linear shapes."""
    k1, k2, k3, k4 = jax.random.split(key, 4)
    bound1 = 1.0 / jnp.sqrt(2.0 * hidden_size)
    bound2 = 1.0 / jnp.sqrt(1.0 * hidden_size)
    return {
        "w1": jax.random.uniform(k1, (hidden_size, 2 * hidden_size),
                                 jnp.float32, -bound1, bound1),
        "b1": jax.random.uniform(k2, (hidden_size,), jnp.float32, -bound1, bound1),
        "w2": jax.random.uniform(k3, (1, hidden_size), jnp.float32, -bound2, bound2),
        "b2": jax.random.uniform(k4, (1,), jnp.float32, -bound2, bound2),
    }


def _reference(encoder_hiddens, decoder_hidden, params):
    # Pure-JAX reference mirroring the PyTorch forward exactly.
    S = encoder_hiddens.shape[0]
    dec_rep = jnp.tile(decoder_hidden, (S, 1, 1))
    cat = jnp.concatenate([encoder_hiddens, dec_rep], axis=2).squeeze(1)
    h = jnp.tanh(cat @ params["w1"].T + params["b1"])
    score = h @ params["w2"].T + params["b2"]
    w = jax.nn.softmax(score, axis=0)
    out = w.T @ encoder_hiddens.squeeze(1)
    return out[:, None, :]


if __name__ == "__main__":
    key = jax.random.PRNGKey(0)
    k_enc, k_dec, k_par = jax.random.split(key, 3)

    S, H = 8, 32
    encoder_hiddens = jax.random.normal(k_enc, (S, 1, H), jnp.float32)
    decoder_hidden = jax.random.normal(k_dec, (1, 1, H), jnp.float32)
    params = init_params(k_par, H)

    ref = _reference(encoder_hiddens, decoder_hidden, params)

    # f32 weight path (tight tolerance; exact softmax normalization).
    prep_f32 = prepare_params(params, H, compute_dtype=jnp.float32)
    out_f32 = jax.block_until_ready(
        mlp_attention(encoder_hiddens, decoder_hidden, prep_f32))
    assert out_f32.shape == (1, 1, H)
    assert jnp.allclose(out_f32, ref, atol=1e-4, rtol=1e-4), (
        "max|diff|=%g" % float(jnp.max(jnp.abs(out_f32 - ref))))

    # bf16 weight-storage path (f32 MXU accumulation, f32 enc), looser tolerance.
    prep_bf16 = prepare_params(params, H, compute_dtype=jnp.bfloat16)
    out_bf16 = jax.block_until_ready(
        mlp_attention(encoder_hiddens, decoder_hidden, prep_bf16))
    assert jnp.allclose(out_bf16, ref, atol=3e-2, rtol=3e-2), (
        "max|diff|=%g" % float(jnp.max(jnp.abs(out_bf16 - ref))))

    print("KERNEL_OK")
</pallas_src>

<mosaic_0001>
module attributes {stable_mosaic.version = 11 : i64} {
  func.func @_mlp_attn_kernel(%arg0: memref<8x32xf32, #tpu.memory_space<vmem>>, %arg1: memref<32x32xf32, #tpu.memory_space<vmem>>, %arg2: memref<1x32xf32, #tpu.memory_space<vmem>>, %arg3: memref<1x32xf32, #tpu.memory_space<vmem>>, %arg4: memref<1xf32, #tpu.memory_space<smem>>, %arg5: memref<1x32xf32, #tpu.memory_space<vmem>>) attributes {dimension_semantics = [], scalar_prefetch = 0 : i64, scratch_operands = 0 : i64, tpu.core_type = #tpu.core_type<tc>} {
    %c0 = arith.constant 0 : index
    %c0_0 = arith.constant 0 : index
    %0 = vector.load %arg0[%c0, %c0_0] : memref<8x32xf32, #tpu.memory_space<vmem>>, vector<8x32xf32>
    %c0_1 = arith.constant 0 : index
    %c0_2 = arith.constant 0 : index
    %1 = vector.load %arg1[%c0_1, %c0_2] : memref<32x32xf32, #tpu.memory_space<vmem>>, vector<32x32xf32>
    %cst = arith.constant dense<0.000000e+00> : vector<8x32xf32>
    %2 = tpu.matmul %0, %1, %cst {dimension_numbers = #tpu.dot_dimension_numbers<[1], [0], [0], [1], [0, 0, 1, 1], [], []>} : vector<8x32xf32>, vector<32x32xf32>, vector<8x32xf32> -> vector<8x32xf32>
    %c0_3 = arith.constant 0 : index
    %c0_4 = arith.constant 0 : index
    %3 = vector.load %arg2[%c0_3, %c0_4] : memref<1x32xf32, #tpu.memory_space<vmem>>, vector<1x32xf32>
    %4 = vector.broadcast %3 : vector<1x32xf32> to vector<8x32xf32>
    %5 = arith.addf %2, %4 : vector<8x32xf32>
    %6 = math.tanh %5 : vector<8x32xf32>
    %c0_5 = arith.constant 0 : index
    %c0_6 = arith.constant 0 : index
    %7 = vector.load %arg3[%c0_5, %c0_6] : memref<1x32xf32, #tpu.memory_space<vmem>>, vector<1x32xf32>
    %8 = vector.broadcast %7 : vector<1x32xf32> to vector<8x32xf32>
    %9 = arith.mulf %6, %8 : vector<8x32xf32>
    %cst_7 = arith.constant dense<0.000000e+00> : vector<8xf32>
    %10 = vector.multi_reduction <add>, %9, %cst_7 [1] : vector<8x32xf32> to vector<8xf32>
    %11 = vector.shape_cast %10 : vector<8xf32> to vector<8x1xf32>
    %c0_8 = arith.constant 0 : index
    %12 = memref.load %arg4[%c0_8] : memref<1xf32, #tpu.memory_space<smem>>
    %13 = vector.broadcast %12 : f32 to vector<8x1xf32>
    %14 = arith.addf %11, %13 : vector<8x1xf32>
    %cst_9 = arith.constant dense<0xFF800000> : vector<1xf32>
    %15 = vector.multi_reduction <maximumf>, %14, %cst_9 [0] : vector<8x1xf32> to vector<1xf32>
    %16 = vector.shape_cast %15 : vector<1xf32> to vector<1x1xf32>
    %17 = vector.broadcast %16 : vector<1x1xf32> to vector<8x1xf32>
    %18 = arith.subf %14, %17 : vector<8x1xf32>
    %19 = math.exp %18 : vector<8x1xf32>
    %cst_10 = arith.constant dense<0.000000e+00> : vector<1xf32>
    %20 = vector.multi_reduction <add>, %19, %cst_10 [0] : vector<8x1xf32> to vector<1xf32>
    %21 = vector.shape_cast %20 : vector<1xf32> to vector<1x1xf32>
    %22 = vector.broadcast %21 : vector<1x1xf32> to vector<8x1xf32>
    %23 = arith.divf %19, %22 : vector<8x1xf32>
    %24 = vector.broadcast %23 : vector<8x1xf32> to vector<8x32xf32>
    %25 = arith.mulf %24, %0 : vector<8x32xf32>
    %cst_11 = arith.constant dense<0.000000e+00> : vector<32xf32>
    %26 = vector.multi_reduction <add>, %25, %cst_11 [0] : vector<8x32xf32> to vector<32xf32>
    %27 = vector.shape_cast %26 : vector<32xf32> to vector<1x32xf32>
    %c0_12 = arith.constant 0 : index
    %c0_13 = arith.constant 0 : index
    %28 = vector.load %arg5[%c0_12, %c0_13] : memref<1x32xf32, #tpu.memory_space<vmem>>, vector<1x32xf32>
    tpu.vector_store %arg5[%c0_12, %c0_13], %27 {strides = array<i32>} : memref<1x32xf32, #tpu.memory_space<vmem>>, vector<1x32xf32>,
    return
  }
}

</mosaic_0001>

<llo_original>
// kernel: mlp_attention.1
$region0: #{mlp_attention.1}
  #allocation0 [shape = 'u32[]', space=smem, size = 0x4, offset = 0x4, fixed_abs, tag = 'smem constant byte address 0x4 - core index']
  #allocation1 [shape = 'u32[72,128]{1,0:T(1,128)}', space=vmem, size = 0x9000, scoped, tag = 'internal scratch']
  #allocation2 [shape = 'f32[1]{0:T(128)S(6)}', space=smem, size = 0x200, scoped, tag = 'scoped memory for mlp_attention.1']
  %s0 = inlined_call_operand.vmem [shape: f32[8,32], index: 0, kind: input, shape index: {}]
  %s1 = inlined_call_operand.vmem [shape: f32[32,32], index: 1, kind: input, shape index: {}]
  %s2 = inlined_call_operand.vmem [shape: f32[1,32], index: 2, kind: input, shape index: {}]
  %s3 = inlined_call_operand.vmem [shape: f32[1,32], index: 3, kind: input, shape index: {}]
  %s4 = inlined_call_operand.<no memory space> [shape: f32[1], index: 4, kind: input, shape index: {}]
  %s5 = inlined_call_operand.hbm [shape: f32[1,32], index: 5, kind: output, shape index: {}]
  %s6 = sld [smem:[#allocation0]]
  $region30: #{mlp_attention.1} parent=0
    _
  %s8 = ssub.s32 1, %s6
  %s9 = scalar_select 0, %s8, %s6
  %10 = sst [smem:[#allocation2]] %s4
  $region1: #{mlp_attention.1} parent=0
    #allocation3 [shape = 'u8[512]{0}', space=vmem, size = 0x400, scoped, tag = 'output window, operand 0, single buffered']
    #allocation4 [shape = 's32[1]{0}', space=sflag, size = 0x4, scoped, tag = 'scoped memory for mlp_attention.1']
    %11 = vsyncpa [#allocation4], 0
    // Predicated region
    $region2: #{mlp_attention.1} parent=1 // pred_check
      _
    $region3: #{mlp_attention.1} parent=1 // pred_check_branch
      %13 = sbr.rel (0) target = $region5
    $region4: #{mlp_attention.1} parent=1 // pred_region
      _
    $region5: #{mlp_attention.1} parent=1 // pred_fallthru
      _
    // Predicated region
    $region6: #{mlp_attention.1} parent=1 // pred_check
      _
    $region7: #{mlp_attention.1} parent=1 // pred_check_branch
      %15 = sbr.rel (0) target = $region9
    $region8: #{mlp_attention.1} parent=1 // pred_region
      _
    $region9: #{mlp_attention.1} parent=1 // pred_fallthru
      _
    // Predicated region
    $region10: #{mlp_attention.1} parent=1 // pred_check
      _
    $region11: #{mlp_attention.1} parent=1 // pred_check_branch
      %17 = sbr.rel (0) target = $region13
    $region12: #{mlp_attention.1} parent=1 // pred_region
      _
    $region13: #{mlp_attention.1} parent=1 // pred_fallthru
      _
    // Predicated region
    $region14: #{mlp_attention.1} parent=1 // pred_check
      _
    $region15: #{mlp_attention.1} parent=1 // pred_check_branch
      %19 = sbr.rel (0) target = $region17
    $region16: #{mlp_attention.1} parent=1 // pred_region
      _
    $region17: #{mlp_attention.1} parent=1 // pred_fallthru
      _
    // Predicated region
    $region18: #{mlp_attention.1} parent=1 // pred_check
      _
    $region19: #{mlp_attention.1} parent=1 // pred_check_branch
      %21 = sbr.rel (0) target = $region21
    $region20: #{mlp_attention.1} parent=1 // pred_region
      _
    $region21: #{mlp_attention.1} parent=1 // pred_fallthru
      _
    %v22 = vld [vmem:[%s0] sm:$0xff]
    %v23 = vld [vmem:[%s1] sm:$0xff]
    %v24 = vld [vmem:[%s1 + $0x8] sm:$0xff]
    %v25 = vld [vmem:[%s1 + $0x10] sm:$0xff]
    %v26 = vld [vmem:[%s1 + $0x18] sm:$0xff]
    %v27 = vld [vmem:[%s2] sm:$0x1]
    %v29 = vperm.slane %v27, 0
    %vm31 = vcmask 261120
    %v33 = vsel %vm31, %v22, 0
    %35 = vmatpush.msra.mxu0 0.0
    %36 = vmatpush.msra.mxu0 0.0
    %37 = vmatpush.msra.mxu0 0.0
    %38 = vmatpush.msra.mxu0 0.0
    %39 = vmatpush.msra.mxu0 0.0
    %40 = vmatpush.msra.mxu0 0.0
    %41 = vmatpush.msra.mxu0 0.0
    %42 = vmatpush.msra.mxu0 0.0
    %43 = vmatpush.msra.mxu0 0.0
    %44 = vmatpush.msra.mxu0 0.0
    %45 = vmatpush.msra.mxu0 0.0
    %46 = vmatpush.msra.mxu0 0.0
    %47 = vmatpush.msra.mxu0 %v26
    %48 = vmatpush.msra.mxu0 %v25
    %49 = vmatpush.msra.mxu0 %v24
    %50 = vmatpush.msra.mxu0 %v23
    %51 = vmatmul.f32.gmra.mxu0 %v33
    %v52 = vpop.f32.mrf.mxu0
    %v53 = vadd.f32 %v29, %v52
    %54 = vdwg.mxu0
    %v55 = vtanh.pop %v53
    %v56 = vld [vmem:[%s3] sm:$0x1]
    %v58 = vperm.slane %v56, 0
    %v60 = vmul.f32 %v55, %v58
    %v61 = vsel %vm31, %v60, 0.0
    %62 = vadd.xlane.f32.xlu0 %v61
    %v63 = vpop.xlane.xlu0 %62
    %s64 = sld [smem:[#allocation2]]
    %v65 = vstv %s64
    %v66 = vadd.f32 %v63, %v65
    %v67 = vrot.slane %v66, 4
    %v68 = vmax.f32 %v66, %v67
    %v69 = vrot.slane %v68, 2
    %v70 = vmax.f32 %v68, %v69
    %v71 = vrot.slane %v70, 1
    %v72 = vmax.f32 %v70, %v71
    %v73 = vsub.f32 %v66, %v72
    %v74 = vmul.f32 %v73, 1.442695
    %v75 = vpow.pop %v74
    %v76 = vrot.slane %v75, 4
    %v77 = vadd.f32 %v75, %v76
    %v78 = vrot.slane %v77, 2
    %v79 = vadd.f32 %v77, %v78
    %v80 = vrot.slane %v79, 1
    %v81 = vadd.f32 %v79, %v80
    %v82 = vrcp.pop %v81
    %v83 = vmul.f32 %v81, %v82
    %v84 = vsub.f32 1.0, %v83
    %v85 = vmul.f32 %v82, %v84
    %v86 = vadd.f32 %v82, %v85
    %vm87 = vweird.f32 %v81
    %vm88 = vweird.f32 %v82
    %vm89 = vmor %vm87, %vm88
    %v90 = vsel %vm89, %v82, %v86
    %v91 = vand.u32 2147483647, %v81
    %vm92 = vcmp.eq.f32.partialorder %v91, 8.507059e+37
    %v93 = vand.u32 %v81, 2147483648
    %v94 = vor.u32 1.1754944e-38, %v93
    %v95 = vsel %vm92, %v94, %v90
    %v96 = vmul.f32 %v75, %v95
    %v97 = vmul.f32 %v96, %v22
    %v98 = vsel %vm31, %v97, 0.0
    %v99 = vrot.slane %v98, 4
    %v100 = vadd.f32 %v98, %v99
    %v101 = vrot.slane %v100, 2
    %v102 = vadd.f32 %v100, %v101
    %v103 = vrot.slane %v102, 1
    %v104 = vadd.f32 %v102, %v103
    %vm105 = vcmask 253952
    %106 = vst.msk [vmem:[#allocation3] sm:$0x1] %vm105, %v104
    // Predicated region
    $region22: #{mlp_attention.1} parent=1 // pred_check
      _
    $region23: #{mlp_attention.1} parent=1 // pred_check_branch
      %108 = sbr.rel (0) target = $region25
    $region24: #{mlp_attention.1} parent=1 // pred_region
      %110 = vsyncadd [#allocation4], 0
      %s112 = sshll.u32 [#allocation3], 4
      %s113 = int_to_ptr.vmem [resolvable:$true] %s112
      %s114 = sshll.u32 %s5, 4
      %s115 = int_to_ptr.hbm [resolvable:$true] %s114
      %117 = dma.vmem_to_hbm [thread:$0]  %s113, 16, %s115, [#allocation4]
    $region25: #{mlp_attention.1} parent=1 // pred_fallthru
      _
    // Predicated region
    $region26: #{mlp_attention.1} parent=1 // pred_check
      _
    $region27: #{mlp_attention.1} parent=1 // pred_check_branch
      %119 = sbr.rel (0) target = $region29
    $region28: #{mlp_attention.1} parent=1 // pred_region
      %121 = dma.done [#allocation4], 16
    $region29: #{mlp_attention.1} parent=1 // pred_fallthru
      _
    %122 = vsyncpa [#allocation4], 1

</llo_original>
